<compile_context>
chip_gen: v5e
topology: v5e:2x2
jax: 0.10.0
libtpu: 0.0.40
codegen_flags: <defaults>
</compile_context>

<pallas_src>
import jax
import jax.numpy as jnp
from jax.experimental import pallas as pl
from jax.experimental.pallas import tpu as pltpu


def lstm_step_kernel(tok_ref, xproj_ref, hc0_ref, whh_ref, hc_ref):
    """Single-token LSTM cell step.

    tok_ref   : SMEM (1,) int32      scalar-prefetched token id
    xproj_ref : VMEM (V, 4H) f32     embedding @ W_ih^T + (b_ih + b_hh)
    hc0_ref   : VMEM (2, H)  f32     packed input state: row 0 = h0, row 1 = c0
    whh_ref   : VMEM (H, 4H) f32     W_hh^T (row-vector @ W layout)
    hc_ref    : VMEM (2, H)  f32     packed output: row 0 = h1, row 1 = c1
    """
    H = hc0_ref.shape[-1]
    tok = tok_ref[0]

    h0 = hc0_ref[0:1, :]                                              # (1, H)
    c0 = hc0_ref[1:2, :]                                              # (1, H)

    # In-kernel embedding "gather": one dynamic-sublane row load of the
    # pre-projected table (this IS emb @ W_ih^T + b_ih + b_hh, folded at init).
    gx = xproj_ref[pl.ds(tok, 1), :]                                  # (1, 4H)

    # Single MXU matmul on the critical path.
    gates = gx + jnp.dot(h0, whh_ref[...],
                         preferred_element_type=jnp.float32)          # (1, 4H)

    # Whole-vreg EUP passes (2 pushes total), then cheap lane slices.
    sg = jax.nn.sigmoid(gates)
    th = jnp.tanh(gates)
    i_g = sg[:, 0 * H:1 * H]
    f_g = sg[:, 1 * H:2 * H]
    g_g = th[:, 2 * H:3 * H]
    o_g = sg[:, 3 * H:4 * H]

    c1 = f_g * c0 + i_g * g_g
    h1 = o_g * jnp.tanh(c1)

    # Packed output: one writeback DMA for both states.
    hc_ref[0:1, :] = h1.astype(hc_ref.dtype)
    hc_ref[1:2, :] = c1.astype(hc_ref.dtype)


def encoder_lstm_step(tok, xproj, hc0, whh_t):
    """tok (1,) i32, xproj (V,4H), hc0 (2,H), whh_t (H,4H) -> h1, c1 each (1,H)."""
    V, G = xproj.shape
    H = hc0.shape[-1]

    def full(shape):
        # Full-array block; index_map receives (grid_idx, scalar_prefetch_ref).
        return pl.BlockSpec(shape, lambda i, tok_ref: (0,) * len(shape))

    hc = pl.pallas_call(
        lstm_step_kernel,
        out_shape=jax.ShapeDtypeStruct((2, H), jnp.float32),
        grid_spec=pltpu.PrefetchScalarGridSpec(
            num_scalar_prefetch=1,
            grid=(1,),
            in_specs=[full((V, G)), full((2, H)), full((H, G))],
            out_specs=full((2, H)),
        ),
        compiler_params=pltpu.CompilerParams(
            dimension_semantics=("arbitrary",)),
    )(tok, xproj, hc0, whh_t)
    return hc[0:1, :], hc[1:2, :]


class EncoderPallas:
    """Deterministically-initialized synthetic Encoder (Embedding + 1-layer LSTM)."""

    def __init__(self, vocab_size, hidden_size, embedding_dim, key):
        self.vocab_size = vocab_size
        self.hidden_size = hidden_size
        self.embedding_dim = embedding_dim
        ks = jax.random.split(key, 5)
        scale = 0.1
        self.embedding = scale * jax.random.normal(
            ks[0], (vocab_size, embedding_dim), jnp.float32)
        # Weights stored pre-transposed for row-vector @ W inside the kernel.
        # Gate order along the 4H axis is [i, f, g, o] == torch.nn.LSTM.
        self.w_ih_t = scale * jax.random.normal(
            ks[1], (embedding_dim, 4 * hidden_size), jnp.float32)
        self.w_hh_t = scale * jax.random.normal(
            ks[2], (hidden_size, 4 * hidden_size), jnp.float32)
        self.b_ih = scale * jax.random.normal(ks[3], (4 * hidden_size,), jnp.float32)
        self.b_hh = scale * jax.random.normal(ks[4], (4 * hidden_size,), jnp.float32)
        # Exact fold of the input projection + both biases into a per-token
        # table: xproj[t] == embedding[t] @ W_ih^T + b_ih + b_hh.
        self.xproj = (self.embedding @ self.w_ih_t
                      + (self.b_ih + self.b_hh)[None, :]).astype(jnp.float32)

    def forward(self, x, h0, c0):
        # x: scalar int token id; h0, c0: (num_layers=1, batch=1, H)
        H = self.hidden_size
        tok = jnp.asarray(x, jnp.int32).reshape(1)
        hc0 = jnp.concatenate([h0.reshape(1, H), c0.reshape(1, H)], axis=0)
        h1, c1 = encoder_lstm_step(tok, self.xproj, hc0, self.w_hh_t)
        out = h1.reshape(1, 1, H)                 # LSTM output (seq=1, batch=1, H)
        return out, (h1.reshape(1, 1, H), c1.reshape(1, 1, H))

    def forward_ref(self, x, h0, c0):
        """Pure-JAX, torch-faithful (un-fused) reference for validation."""
        H = self.hidden_size
        emb = self.embedding[x].reshape(1, self.embedding_dim)
        gates = (emb @ self.w_ih_t + self.b_ih[None, :]
                 + h0.reshape(1, H) @ self.w_hh_t + self.b_hh[None, :])
        i = jax.nn.sigmoid(gates[:, 0 * H:1 * H])
        f = jax.nn.sigmoid(gates[:, 1 * H:2 * H])
        g = jnp.tanh(gates[:, 2 * H:3 * H])
        o = jax.nn.sigmoid(gates[:, 3 * H:4 * H])
        c1 = f * c0.reshape(1, H) + i * g
        h1 = o * jnp.tanh(c1)
        return (h1.reshape(1, 1, H),
                (h1.reshape(1, 1, H), c1.reshape(1, 1, H)))


if __name__ == "__main__":
    vocab_size, hidden_size, embedding_dim = 16, 32, 32

    key = jax.random.PRNGKey(0)
    k_params, k_h, k_c, k_tok = jax.random.split(key, 4)

    enc = EncoderPallas(vocab_size, hidden_size, embedding_dim, k_params)

    x = jax.random.randint(k_tok, (), 0, vocab_size)                 # single token id
    h0 = jax.random.normal(k_h, (1, 1, hidden_size), jnp.float32)    # (num_layers, batch, H)
    c0 = jax.random.normal(k_c, (1, 1, hidden_size), jnp.float32)

    out, (h_n, c_n) = enc.forward(x, h0, c0)
    jax.block_until_ready((out, h_n, c_n))

    out_r, (h_r, c_r) = enc.forward_ref(x, h0, c0)
    assert out.shape == (1, 1, hidden_size)
    assert h_n.shape == (1, 1, hidden_size) and c_n.shape == (1, 1, hidden_size)
    # 2e-5: allows for accumulation-order differences between the init-time
    # (V,E)@(E,4H) fold and the reference's (1,E)@(E,4H) matmul (all f32).
    assert jnp.allclose(out, out_r, atol=2e-5)
    assert jnp.allclose(h_n, h_r, atol=2e-5)
    assert jnp.allclose(c_n, c_r, atol=2e-5)

    print("KERNEL_OK")
</pallas_src>

<mosaic_0001>
module attributes {stable_mosaic.version = 11 : i64} {
  func.func @lstm_step_kernel(%arg0: i32, %arg1: memref<1xi32, #tpu.memory_space<smem>>, %arg2: memref<16x128xf32, #tpu.memory_space<vmem>>, %arg3: memref<2x32xf32, #tpu.memory_space<vmem>>, %arg4: memref<32x128xf32, #tpu.memory_space<vmem>>, %arg5: memref<2x32xf32, #tpu.memory_space<vmem>>) attributes {dimension_semantics = [#tpu.dimension_semantics<arbitrary>], iteration_bounds = array<i64: 1>, scalar_prefetch = 1 : i64, scratch_operands = 0 : i64, tpu.core_type = #tpu.core_type<tc>, window_params = [{pipeline_mode = #tpu.pipeline_mode<synchronous>, transform_indices = @transform_0, window_bounds = array<i64: 16, 128>}, {pipeline_mode = #tpu.pipeline_mode<synchronous>, transform_indices = @transform_1, window_bounds = array<i64: 2, 32>}, {pipeline_mode = #tpu.pipeline_mode<synchronous>, transform_indices = @transform_2, window_bounds = array<i64: 32, 128>}, {pipeline_mode = #tpu.pipeline_mode<synchronous>, transform_indices = @transform_3, window_bounds = array<i64: 2, 32>}]} {
    %c0 = arith.constant 0 : index
    %0 = memref.load %arg1[%c0] : memref<1xi32, #tpu.memory_space<smem>>
    %c0_0 = arith.constant 0 : index
    %c0_1 = arith.constant 0 : index
    %1 = vector.load %arg3[%c0_0, %c0_1] : memref<2x32xf32, #tpu.memory_space<vmem>>, vector<1x32xf32>
    %c1 = arith.constant 1 : index
    %c0_2 = arith.constant 0 : index
    %2 = vector.load %arg3[%c1, %c0_2] : memref<2x32xf32, #tpu.memory_space<vmem>>, vector<1x32xf32>
    %3 = arith.index_cast %0 : i32 to index
    %c0_3 = arith.constant 0 : index
    %4 = vector.load %arg2[%3, %c0_3] : memref<16x128xf32, #tpu.memory_space<vmem>>, vector<1x128xf32>
    %c0_4 = arith.constant 0 : index
    %c0_5 = arith.constant 0 : index
    %5 = vector.load %arg4[%c0_4, %c0_5] : memref<32x128xf32, #tpu.memory_space<vmem>>, vector<32x128xf32>
    %cst = arith.constant dense<0.000000e+00> : vector<1x128xf32>
    %6 = tpu.matmul %1, %5, %cst {dimension_numbers = #tpu.dot_dimension_numbers<[1], [0], [0], [1], [0, 0, 1, 1], [], []>} : vector<1x32xf32>, vector<32x128xf32>, vector<1x128xf32> -> vector<1x128xf32>
    %7 = arith.addf %4, %6 : vector<1x128xf32>
    %8 = arith.negf %7 : vector<1x128xf32>
    %9 = math.exp %8 : vector<1x128xf32>
    %cst_6 = arith.constant 1.000000e+00 : f32
    %10 = vector.broadcast %cst_6 : f32 to vector<1x128xf32>
    %11 = arith.addf %10, %9 : vector<1x128xf32>
    %12 = arith.divf %10, %11 : vector<1x128xf32>
    %13 = math.tanh %7 : vector<1x128xf32>
    %14 = vector.extract_strided_slice %12 {offsets = [0, 0], sizes = [1, 32], strides = [1, 1]} : vector<1x128xf32> to vector<1x32xf32>
    %15 = vector.extract_strided_slice %12 {offsets = [0, 32], sizes = [1, 32], strides = [1, 1]} : vector<1x128xf32> to vector<1x32xf32>
    %16 = vector.extract_strided_slice %13 {offsets = [0, 64], sizes = [1, 32], strides = [1, 1]} : vector<1x128xf32> to vector<1x32xf32>
    %17 = vector.extract_strided_slice %12 {offsets = [0, 96], sizes = [1, 32], strides = [1, 1]} : vector<1x128xf32> to vector<1x32xf32>
    %18 = arith.mulf %15, %2 : vector<1x32xf32>
    %19 = arith.mulf %14, %16 : vector<1x32xf32>
    %20 = arith.addf %18, %19 : vector<1x32xf32>
    %21 = math.tanh %20 : vector<1x32xf32>
    %22 = arith.mulf %17, %21 : vector<1x32xf32>
    %c0_7 = arith.constant 0 : index
    %c0_8 = arith.constant 0 : index
    %23 = vector.load %arg5[%c0_7, %c0_8] : memref<2x32xf32, #tpu.memory_space<vmem>>, vector<1x32xf32>
    tpu.vector_store %arg5[%c0_7, %c0_8], %22 {strides = array<i32>} : memref<2x32xf32, #tpu.memory_space<vmem>>, vector<1x32xf32>,
    %c1_9 = arith.constant 1 : index
    %c0_10 = arith.constant 0 : index
    %24 = vector.load %arg5[%c1_9, %c0_10] : memref<2x32xf32, #tpu.memory_space<vmem>>, vector<1x32xf32>
    tpu.vector_store %arg5[%c1_9, %c0_10], %20 {strides = array<i32>} : memref<2x32xf32, #tpu.memory_space<vmem>>, vector<1x32xf32>,
    return
  }
  func.func @transform_0(%arg0: i32, %arg1: memref<1xi32, #tpu.memory_space<smem>>) -> (i32, i32) {
    %c0_i32 = arith.constant 0 : i32
    %c0_i32_0 = arith.constant 0 : i32
    %c0_i32_1 = arith.constant 0 : i32
    return %c0_i32, %c0_i32_0 : i32, i32
  }
  func.func @transform_1(%arg0: i32, %arg1: memref<1xi32, #tpu.memory_space<smem>>) -> (i32, i32) {
    %c0_i32 = arith.constant 0 : i32
    %c0_i32_0 = arith.constant 0 : i32
    %c0_i32_1 = arith.constant 0 : i32
    return %c0_i32, %c0_i32_0 : i32, i32
  }
  func.func @transform_2(%arg0: i32, %arg1: memref<1xi32, #tpu.memory_space<smem>>) -> (i32, i32) {
    %c0_i32 = arith.constant 0 : i32
    %c0_i32_0 = arith.constant 0 : i32
    %c0_i32_1 = arith.constant 0 : i32
    return %c0_i32, %c0_i32_0 : i32, i32
  }
  func.func @transform_3(%arg0: i32, %arg1: memref<1xi32, #tpu.memory_space<smem>>) -> (i32, i32) {
    %c0_i32 = arith.constant 0 : i32
    %c0_i32_0 = arith.constant 0 : i32
    %c0_i32_1 = arith.constant 0 : i32
    return %c0_i32, %c0_i32_0 : i32, i32
  }
}

</mosaic_0001>

<llo_original>
// kernel: tpu_custom_call.1
$region0: #{tpu_custom_call.1}
  #allocation0 [shape = 'u32[]', space=smem, size = 0x4, offset = 0x4, fixed_abs, tag = 'smem constant byte address 0x4 - core index']
  #allocation1 [shape = 'u32[72,128]{1,0:T(1,128)}', space=vmem, size = 0x9000, scoped, tag = 'internal scratch']
  #allocation2 [shape = 's32[1]{0}', space=sflag, size = 0x4, scoped, tag = 'scoped memory for tpu_custom_call.1']
  #allocation3 [shape = 's32[1]{0:T(128)S(6)}', space=smem, size = 0x200, scoped, tag = 'prefetched SMEM operand 0']
  %s0 = inlined_call_operand.<no memory space> [shape: s32[1], index: 0, kind: input, shape index: {}]
  %s1 = inlined_call_operand.hbm [shape: f32[16,128], index: 1, kind: input, shape index: {}]
  %s2 = inlined_call_operand.vmem [shape: f32[2,32], index: 2, kind: input, shape index: {}]
  %s3 = inlined_call_operand.hbm [shape: f32[32,128], index: 3, kind: input, shape index: {}]
  %s4 = inlined_call_operand.hbm [shape: f32[2,32], index: 4, kind: output, shape index: {}]
  %s5 = sld [smem:[#allocation0]]
  $region30: #{tpu_custom_call.1} parent=0
    _
  %s7 = ssub.s32 1, %s5
  %s8 = scalar_select 0, %s7, %s5
  %9 = sst [smem:[#allocation3]] %s0
  $region1: #{tpu_custom_call.1} parent=0
    #allocation4 [shape = 'u8[8192]{0}', space=vmem, size = 0x2000, scoped, tag = 'input window, operand 1, single buffered']
    #allocation5 [shape = 's32[1]{0}', space=sflag, size = 0x4, scoped, tag = 'scoped memory for tpu_custom_call.1']
    #allocation6 [shape = 's32[1]{0}', space=sflag, size = 0x4, scoped, tag = 'scoped memory for tpu_custom_call.1']
    #allocation7 [shape = 'u8[16384]{0}', space=vmem, size = 0x4000, scoped, tag = 'input window, operand 3, single buffered']
    #allocation8 [shape = 's32[1]{0}', space=sflag, size = 0x4, scoped, tag = 'scoped memory for tpu_custom_call.1']
    #allocation9 [shape = 'u8[1024]{0}', space=vmem, size = 0x400, scoped, tag = 'output window, operand 0, single buffered']
    %10 = vsyncpa [#allocation5], 0
    %11 = vsyncpa [#allocation8], 0
    %12 = vsyncpa [#allocation6], 0
    // Predicated region
    $region2: #{tpu_custom_call.1} parent=1 // pred_check
      _
    $region3: #{tpu_custom_call.1} parent=1 // pred_check_branch
      %14 = sbr.rel (0) target = $region5
    $region4: #{tpu_custom_call.1} parent=1 // pred_region
      %16 = vsyncadd [#allocation5], 0
      %s17 = sshll.u32 %s1, 4
      %s18 = int_to_ptr.hbm [resolvable:$true] %s17
      %s19 = sshll.u32 [#allocation4], 4
      %s20 = int_to_ptr.vmem [resolvable:$true] %s19
      %25 = dma.hbm_to_vmem [thread:$0]  %s18, 256, %s20, [#allocation5], 128, 128, 8
    $region5: #{tpu_custom_call.1} parent=1 // pred_fallthru
      _
    // Predicated region
    $region6: #{tpu_custom_call.1} parent=1 // pred_check
      _
    $region7: #{tpu_custom_call.1} parent=1 // pred_check_branch
      %27 = sbr.rel (0) target = $region9
    $region8: #{tpu_custom_call.1} parent=1 // pred_region
      _
    $region9: #{tpu_custom_call.1} parent=1 // pred_fallthru
      _
    // Predicated region
    $region10: #{tpu_custom_call.1} parent=1 // pred_check
      _
    $region11: #{tpu_custom_call.1} parent=1 // pred_check_branch
      %29 = sbr.rel (0) target = $region13
    $region12: #{tpu_custom_call.1} parent=1 // pred_region
      %31 = vsyncadd [#allocation8], 0
      %s32 = sshll.u32 %s3, 4
      %s33 = int_to_ptr.hbm [resolvable:$true] %s32
      %s34 = sshll.u32 [#allocation7], 4
      %s35 = int_to_ptr.vmem [resolvable:$true] %s34
      %40 = dma.hbm_to_vmem [thread:$0]  %s33, 512, %s35, [#allocation8], 128, 128, 8
    $region13: #{tpu_custom_call.1} parent=1 // pred_fallthru
      _
    // Predicated region
    $region14: #{tpu_custom_call.1} parent=1 // pred_check
      _
    $region15: #{tpu_custom_call.1} parent=1 // pred_check_branch
      %42 = sbr.rel (0) target = $region17
    $region16: #{tpu_custom_call.1} parent=1 // pred_region
      %44 = dma.done [#allocation5], 256
    $region17: #{tpu_custom_call.1} parent=1 // pred_fallthru
      _
    // Predicated region
    $region18: #{tpu_custom_call.1} parent=1 // pred_check
      _
    $region19: #{tpu_custom_call.1} parent=1 // pred_check_branch
      %46 = sbr.rel (0) target = $region21
    $region20: #{tpu_custom_call.1} parent=1 // pred_region
      %48 = dma.done [#allocation8], 512
    $region21: #{tpu_custom_call.1} parent=1 // pred_fallthru
      _
    %s49 = sld [smem:[#allocation3]]
    %v50 = vld [vmem:[%s2] sm:$0x1]
    %v51 = vld [vmem:[%s2 + $0x1] sm:$0x1]
    %s52 = scalar_lea.vmem [#allocation4], %s49
    %v53 = vld [vmem:[%s52] sm:$0x1]
    %v54 = vld [vmem:[#allocation7] sm:$0xff]
    %v55 = vld [vmem:[#allocation7 + $0x8] sm:$0xff]
    %v56 = vld [vmem:[#allocation7 + $0x10] sm:$0xff]
    %v57 = vld [vmem:[#allocation7 + $0x18] sm:$0xff]
    %vm58 = vcmask 261120
    %v60 = vsel %vm58, %v50, 0
    %62 = vmatpush.msra.mxu0 0.0
    %63 = vmatpush.msra.mxu0 0.0
    %64 = vmatpush.msra.mxu0 0.0
    %65 = vmatpush.msra.mxu0 0.0
    %66 = vmatpush.msra.mxu0 0.0
    %67 = vmatpush.msra.mxu0 0.0
    %68 = vmatpush.msra.mxu0 0.0
    %69 = vmatpush.msra.mxu0 0.0
    %70 = vmatpush.msra.mxu0 0.0
    %71 = vmatpush.msra.mxu0 0.0
    %72 = vmatpush.msra.mxu0 0.0
    %73 = vmatpush.msra.mxu0 0.0
    %74 = vmatpush.msra.mxu0 %v57
    %75 = vmatpush.msra.mxu0 %v56
    %76 = vmatpush.msra.mxu0 %v55
    %77 = vmatpush.msra.mxu0 %v54
    %78 = vmatmul.f32.gmra.mxu0 %v60
    %v79 = vpop.f32.mrf.mxu0
    %v80 = vadd.f32 0.0, %v79
    %81 = vdwg.mxu0
    %v82 = vadd.f32 %v53, %v80
    %v83 = vxor.u32 %v82, 2147483648
    %v84 = vmul.f32 %v83, 1.442695
    %v85 = vpow.pop %v84
    %v86 = vadd.f32 %v85, 1.0
    %v87 = vrcp.pop %v86
    %v88 = vmul.f32 %v86, %v87
    %v89 = vsub.f32 1.0, %v88
    %v90 = vmul.f32 %v87, %v89
    %v91 = vadd.f32 %v87, %v90
    %vm92 = vweird.f32 %v86
    %vm93 = vweird.f32 %v87
    %vm94 = vmor %vm92, %vm93
    %v95 = vsel %vm94, %v87, %v91
    %v96 = vand.u32 2147483647, %v86
    %vm97 = vcmp.eq.f32.partialorder %v96, 8.507059e+37
    %v98 = vand.u32 %v86, 2147483648
    %v99 = vor.u32 1.1754944e-38, %v98
    %v100 = vsel %vm97, %v99, %v95
    %v101 = vmul.f32 1.0, %v100
    %v102 = vtanh.pop %v82
    %104 = vrot.lane.b32.xlu0 %v51, 32
    %v105 = vpop.permute.xlu0 %104
    %v107 = vmul.f32 %v101, %v105
    %109 = vrot.lane.b32.xlu0 %v102, 64
    %v110 = vpop.permute.xlu0 %109
    %v112 = vmul.f32 %v101, %v110
    %114 = vrot.lane.b32.xlu0 %v112, 32
    %v115 = vpop.permute.xlu0 %114
    %v117 = vadd.f32 %v107, %v115
    %v118 = vtanh.pop %v117
    %120 = vrot.lane.b32.xlu0 %v118, 64
    %v121 = vpop.permute.xlu0 %120
    %v123 = vmul.f32 %v101, %v121
    %125 = vrot.lane.b32.xlu0 %v123, 32
    %v126 = vpop.permute.xlu0 %125
    %vm128 = vcmask 253952
    %129 = vst.msk [vmem:[#allocation9] sm:$0x1] %vm128, %v126
    %131 = vrot.lane.b32.xlu0 %v117, 96
    %v132 = vpop.permute.xlu0 %131
    %134 = vst.msk [vmem:[#allocation9 + $0x1] sm:$0x1] %vm128, %v132
    // Predicated region
    $region22: #{tpu_custom_call.1} parent=1 // pred_check
      _
    $region23: #{tpu_custom_call.1} parent=1 // pred_check_branch
      %136 = sbr.rel (0) target = $region25
    $region24: #{tpu_custom_call.1} parent=1 // pred_region
      %138 = vsyncadd [#allocation6], 0
      %s140 = sshll.u32 [#allocation9], 4
      %s141 = int_to_ptr.vmem [resolvable:$true] %s140
      %s142 = sshll.u32 %s4, 4
      %s143 = int_to_ptr.hbm [resolvable:$true] %s142
      %145 = dma.vmem_to_hbm [thread:$0]  %s141, 32, %s143, [#allocation6]
    $region25: #{tpu_custom_call.1} parent=1 // pred_fallthru
      _
    // Predicated region
    $region26: #{tpu_custom_call.1} parent=1 // pred_check
      _
    $region27: #{tpu_custom_call.1} parent=1 // pred_check_branch
      %147 = sbr.rel (0) target = $region29
    $region28: #{tpu_custom_call.1} parent=1 // pred_region
      %149 = dma.done [#allocation6], 32
    $region29: #{tpu_custom_call.1} parent=1 // pred_fallthru
      _
    %150 = vsyncpa [#allocation5], 1
    %151 = vsyncpa [#allocation8], 1
    %152 = vsyncpa [#allocation6], 1

</llo_original>
